<compile_context>
chip_gen: v6e
topology: v6e:2x2x1
jax: 0.10.0
libtpu: 0.0.40
codegen_flags: <defaults>
</compile_context>

<pallas_src>
import functools

import jax
import jax.numpy as jnp
from jax.experimental import pallas as pl
from jax.experimental.pallas import tpu as pltpu


# ----------------------- fused single-pass kernel ----------------------------

def _fused_kernel(x_ref, w1_ref, w2t_ref, o_ref, *, inv_hw):
    # x_ref / o_ref : [1, C, HW]   (one batch slab, full spatial extent)
    # w1_ref        : [hid, C]     (dense1.weight)
    # w2t_ref       : [hid, C]     (dense2.weight, pre-transposed)
    xv = x_ref[...]
    pooled = jnp.sum(xv, axis=-1, dtype=jnp.float32) * inv_hw          # [1, C]

    # Tiny squeeze MLP on VPU/XLU (broadcast + reduce; avoids sub-tile MXU
    # matmul lowering).  FLOPs are negligible (~C^2/4 per batch).
    w1f = w1_ref[...].astype(jnp.float32)                              # [hid, C]
    h = jnp.maximum(jnp.sum(w1f * pooled, axis=1, keepdims=True), 0.0) # [hid, 1]
    w2f = w2t_ref[...].astype(jnp.float32)                             # [hid, C]
    t = jnp.sum(w2f * h, axis=0, keepdims=True)                        # [1, C]
    s = t * jnp.clip(t + 3.0, 0.0, 6.0) * (1.0 / 6.0)                  # hardswish

    o_ref[...] = xv * s.astype(xv.dtype)[:, :, None]


# ----------------------- fallback: tiled pooled sums -------------------------

def _pool_kernel(x_ref, psum_ref, *, n_hw, hw_tile, tail_valid):
    # x_ref: [1, C, hw_tile]; psum_ref: [1, C, 1] f32 accumulator resident
    # across the (last, "arbitrary") HW-tile grid axis.
    t = pl.program_id(1)

    @pl.when(t == 0)
    def _():
        psum_ref[...] = jnp.zeros_like(psum_ref)

    if tail_valid is None:
        # HW divides evenly into tiles: never any masking.
        psum_ref[...] += jnp.sum(x_ref[...], axis=-1, keepdims=True,
                                 dtype=jnp.float32)
    else:
        last = n_hw - 1

        @pl.when(t < last)
        def _():
            psum_ref[...] += jnp.sum(x_ref[...], axis=-1, keepdims=True,
                                     dtype=jnp.float32)

        @pl.when(t == last)
        def _():
            # Partial trailing block: OOB lanes are unspecified on read, so
            # mask them to zero before accumulating.
            xv = x_ref[...]
            lane = jax.lax.broadcasted_iota(jnp.int32, xv.shape, 2)
            masked = jnp.where(lane < tail_valid, xv, jnp.zeros_like(xv))
            psum_ref[...] += jnp.sum(masked, axis=-1, keepdims=True,
                                     dtype=jnp.float32)


# ----------------------- fallback: broadcast multiply ------------------------

def _apply_kernel(s_ref, x_ref, o_ref):
    # s_ref: [1, C, 1]; x_ref/o_ref: [1, C, hw_tile].  OOB lanes of the partial
    # trailing x block hold garbage but OOB stores are masked, so the result
    # is correct without any padding/slicing of the full tensor.
    o_ref[...] = x_ref[...] * s_ref[...]


def _pick_hw_tile(hw, c, itemsize, cap_bytes):
    """Largest 128-multiple lane tile with C*tile*itemsize <= cap (>=128 lanes).
    No divisibility requirement on hw: the grid uses cdiv + a masked tail."""
    max_chunks = max(1, cap_bytes // max(1, c * 128 * itemsize))
    hw_chunks = pl.cdiv(hw, 128)
    return int(min(max_chunks, hw_chunks)) * 128


def _vmem_budget():
    # Physical VMEM minus headroom for Mosaic internal scratch
    # (v5e/v6e: 128 MiB -> ~112 MiB usable; v7x: 64 MiB -> ~48 MiB usable).
    try:
        cap = int(pltpu.get_tpu_info().vmem_capacity_bytes)
    except Exception:
        cap = 64 << 20  # conservative (v7x)
    return max(cap - (16 << 20), 16 << 20)


def squeeze_excitation(x, w1, w2, *, force_two_pass=False,
                       tile_cap_bytes=4 << 20):
    """x: [B, C, H, W]; w1: [C//8, C] (dense1.weight); w2: [C, C//8] (dense2.weight)."""
    B, C, H, W = x.shape
    hw = H * W
    hid = w1.shape[0]
    itemsize = jnp.dtype(x.dtype).itemsize
    x2 = x.reshape(B, C, hw)

    budget = _vmem_budget()

    slab_bytes = C * hw * itemsize
    w_bytes = (w1.size + w2.size) * jnp.dtype(w1.dtype).itemsize
    # double-buffered x block + out block + weights + compiler scratch headroom
    fused_need = 4 * slab_bytes + 4 * w_bytes + (8 << 20)

    # ---------------------------- fused path --------------------------------
    if (not force_two_pass) and fused_need <= budget:
        # TODO(synk): on v7x with B == 1 only one TensorCore is used; a
        # core-split over HW halves (partial sums combined in-kernel) would
        # recover the second core's HBM bandwidth.
        out = pl.pallas_call(
            functools.partial(_fused_kernel, inv_hw=1.0 / hw),
            out_shape=jax.ShapeDtypeStruct((B, C, hw), x.dtype),
            grid_spec=pltpu.PrefetchScalarGridSpec(
                num_scalar_prefetch=0,
                grid=(B,),
                in_specs=[
                    pl.BlockSpec((1, C, hw), lambda b: (b, 0, 0)),   # x slab
                    pl.BlockSpec((hid, C), lambda b: (0, 0)),        # w1
                    pl.BlockSpec((hid, C), lambda b: (0, 0)),        # w2^T
                ],
                out_specs=pl.BlockSpec((1, C, hw), lambda b: (b, 0, 0)),
            ),
            compiler_params=pltpu.CompilerParams(
                dimension_semantics=("parallel",),
                vmem_limit_bytes=int(min(max(fused_need, 32 << 20), budget))),
            cost_estimate=pl.CostEstimate(
                flops=2 * B * C * hw + 4 * B * C * hid,
                transcendentals=0,
                bytes_accessed=2 * B * C * hw * itemsize),
        )(x2, w1, w2.T)
        return out.reshape(B, C, H, W)

    # ------------------------- fallback two-pass path ------------------------
    hw_tile = _pick_hw_tile(hw, C, itemsize, tile_cap_bytes)
    n_hw = int(pl.cdiv(hw, hw_tile))
    rem = hw % hw_tile
    tail_valid = None if rem == 0 else rem

    vmem_limit = int(min(max(4 * C * hw_tile * itemsize + (8 << 20),
                             32 << 20), budget))

    # phase 1: pooled sums (reduction axis last, f32 accumulation)
    psum = pl.pallas_call(
        functools.partial(_pool_kernel, n_hw=n_hw, hw_tile=hw_tile,
                          tail_valid=tail_valid),
        out_shape=jax.ShapeDtypeStruct((B, C, 1), jnp.float32),
        grid_spec=pltpu.PrefetchScalarGridSpec(
            num_scalar_prefetch=0,
            grid=(B, n_hw),
            in_specs=[pl.BlockSpec((1, C, hw_tile), lambda b, t: (b, 0, t))],
            out_specs=pl.BlockSpec((1, C, 1), lambda b, t: (b, 0, 0)),
        ),
        compiler_params=pltpu.CompilerParams(
            dimension_semantics=("parallel", "arbitrary"),
            vmem_limit_bytes=vmem_limit),
        cost_estimate=pl.CostEstimate(
            flops=B * C * hw, transcendentals=0,
            bytes_accessed=B * C * hw * itemsize + B * C * 4),
    )(x2)

    # phase 2: tiny squeeze MLP (negligible FLOPs) in plain XLA
    pooled = psum[:, :, 0] * (1.0 / hw)                              # [B, C]
    h = jnp.maximum(pooled @ w1.T.astype(jnp.float32), 0.0)          # [B, hid]
    t = h @ w2.T.astype(jnp.float32)                                 # [B, C]
    scale = t * jnp.clip(t + 3.0, 0.0, 6.0) * (1.0 / 6.0)            # hardswish
    scale = scale.astype(x.dtype)[:, :, None]                        # [B, C, 1]

    # phase 3: broadcast per-channel multiply
    # NOTE: input_output_aliases={1: 0} would save an HBM allocation but is
    # only safe if the caller donates x; left off to keep semantics safe.
    out = pl.pallas_call(
        _apply_kernel,
        out_shape=jax.ShapeDtypeStruct((B, C, hw), x.dtype),
        grid_spec=pltpu.PrefetchScalarGridSpec(
            num_scalar_prefetch=0,
            grid=(B, n_hw),
            in_specs=[
                pl.BlockSpec((1, C, 1), lambda b, t: (b, 0, 0)),        # scale
                pl.BlockSpec((1, C, hw_tile), lambda b, t: (b, 0, t)),  # x
            ],
            out_specs=pl.BlockSpec((1, C, hw_tile), lambda b, t: (b, 0, t)),
        ),
        compiler_params=pltpu.CompilerParams(
            dimension_semantics=("parallel", "parallel"),
            vmem_limit_bytes=vmem_limit),
        cost_estimate=pl.CostEstimate(
            flops=B * C * hw, transcendentals=0,
            bytes_accessed=2 * B * C * hw * itemsize + B * C * itemsize),
    )(scale, x2)

    return out.reshape(B, C, H, W)


def squeeze_excitation_ref(x, w1, w2):
    """Pure-JAX reference mirroring the PyTorch forward."""
    pooled = jnp.mean(x, axis=(2, 3))                    # [B, C]
    h = jnp.maximum(pooled @ w1.T, 0.0)                  # [B, C//8]
    t = h @ w2.T                                         # [B, C]
    s = t * jnp.clip(t + 3.0, 0.0, 6.0) / 6.0            # hardswish
    return s[:, :, None, None] * x


if __name__ == "__main__":
    key = jax.random.PRNGKey(0)
    kx, k1, k2, kx2 = jax.random.split(key, 4)

    # ---- test 1: fused single-pass path ------------------------------------
    B, C, H, W = 2, 16, 16, 16        # channels divisible by ratio=8
    hid = C // 8
    x = jax.random.normal(kx, (B, C, H, W), dtype=jnp.float32)
    w1 = jax.random.normal(k1, (hid, C), dtype=jnp.float32) * (1.0 / jnp.sqrt(C))
    w2 = jax.random.normal(k2, (C, hid), dtype=jnp.float32) * (1.0 / jnp.sqrt(hid))

    out = jax.block_until_ready(jax.jit(squeeze_excitation)(x, w1, w2))
    ref = squeeze_excitation_ref(x, w1, w2)
    assert out.shape == (B, C, H, W)
    assert jnp.allclose(out, ref, atol=1e-5, rtol=1e-5)

    # ---- test 2: fallback two-pass path with a masked (non-128) tail -------
    H2 = W2 = 15                      # hw = 225, not a multiple of 128
    x_b = jax.random.normal(kx2, (B, C, H2, W2), dtype=jnp.float32)
    two_pass = jax.jit(functools.partial(
        squeeze_excitation, force_two_pass=True,
        tile_cap_bytes=C * 128 * 4))  # force 128-lane tiles -> 2 HW steps
    out_b = jax.block_until_ready(two_pass(x_b, w1, w2))
    ref_b = squeeze_excitation_ref(x_b, w1, w2)
    assert out_b.shape == (B, C, H2, W2)
    assert jnp.allclose(out_b, ref_b, atol=1e-5, rtol=1e-5)

    print("KERNEL_OK")
</pallas_src>

<mosaic_0001>
module attributes {stable_mosaic.version = 11 : i64} {
  func.func @_fused_kernel(%arg0: i32, %arg1: memref<1x16x256xf32, #tpu.memory_space<vmem>>, %arg2: memref<2x16xf32, #tpu.memory_space<vmem>>, %arg3: memref<2x16xf32, #tpu.memory_space<vmem>>, %arg4: memref<1x16x256xf32, #tpu.memory_space<vmem>>) attributes {dimension_semantics = [#tpu.dimension_semantics<parallel>], iteration_bounds = array<i64: 2>, scalar_prefetch = 0 : i64, scratch_operands = 0 : i64, tpu.core_type = #tpu.core_type<tc>, window_params = [{transform_indices = @transform_0, window_bounds = array<i64: 1, 16, 256>}, {pipeline_mode = #tpu.pipeline_mode<synchronous>, transform_indices = @transform_1, window_bounds = array<i64: 2, 16>}, {pipeline_mode = #tpu.pipeline_mode<synchronous>, transform_indices = @transform_2, window_bounds = array<i64: 2, 16>}, {transform_indices = @transform_3, window_bounds = array<i64: 1, 16, 256>}]} {
    %c0 = arith.constant 0 : index
    %c0_0 = arith.constant 0 : index
    %c0_1 = arith.constant 0 : index
    %0 = vector.load %arg1[%c0, %c0_0, %c0_1] : memref<1x16x256xf32, #tpu.memory_space<vmem>>, vector<1x16x256xf32>
    %cst = arith.constant dense<0.000000e+00> : vector<1x16xf32>
    %1 = vector.multi_reduction <add>, %0, %cst [2] : vector<1x16x256xf32> to vector<1x16xf32>
    %cst_2 = arith.constant 3.906250e-03 : f32
    %2 = vector.broadcast %cst_2 : f32 to vector<1x16xf32>
    %3 = arith.mulf %1, %2 : vector<1x16xf32>
    %c0_3 = arith.constant 0 : index
    %c0_4 = arith.constant 0 : index
    %4 = vector.load %arg2[%c0_3, %c0_4] : memref<2x16xf32, #tpu.memory_space<vmem>>, vector<2x16xf32>
    %5 = vector.broadcast %3 : vector<1x16xf32> to vector<2x16xf32>
    %6 = arith.mulf %4, %5 : vector<2x16xf32>
    %cst_5 = arith.constant dense<0.000000e+00> : vector<2xf32>
    %7 = vector.multi_reduction <add>, %6, %cst_5 [1] : vector<2x16xf32> to vector<2xf32>
    %8 = vector.shape_cast %7 : vector<2xf32> to vector<2x1xf32>
    %cst_6 = arith.constant 0.000000e+00 : f32
    %9 = vector.broadcast %cst_6 : f32 to vector<2x1xf32>
    %10 = arith.maximumf %8, %9 : vector<2x1xf32>
    %c0_7 = arith.constant 0 : index
    %c0_8 = arith.constant 0 : index
    %11 = vector.load %arg3[%c0_7, %c0_8] : memref<2x16xf32, #tpu.memory_space<vmem>>, vector<2x16xf32>
    %12 = vector.broadcast %10 : vector<2x1xf32> to vector<2x16xf32>
    %13 = arith.mulf %11, %12 : vector<2x16xf32>
    %cst_9 = arith.constant dense<0.000000e+00> : vector<16xf32>
    %14 = vector.multi_reduction <add>, %13, %cst_9 [0] : vector<2x16xf32> to vector<16xf32>
    %15 = vector.shape_cast %14 : vector<16xf32> to vector<1x16xf32>
    %cst_10 = arith.constant 3.000000e+00 : f32
    %16 = vector.broadcast %cst_10 : f32 to vector<1x16xf32>
    %17 = arith.addf %15, %16 : vector<1x16xf32>
    %cst_11 = arith.constant 0.000000e+00 : f32
    %cst_12 = arith.constant 6.000000e+00 : f32
    %18 = vector.broadcast %cst_11 : f32 to vector<1x16xf32>
    %19 = arith.maximumf %18, %17 : vector<1x16xf32>
    %20 = vector.broadcast %cst_12 : f32 to vector<1x16xf32>
    %21 = arith.minimumf %20, %19 : vector<1x16xf32>
    %22 = arith.mulf %15, %21 : vector<1x16xf32>
    %cst_13 = arith.constant 0.166666672 : f32
    %23 = vector.broadcast %cst_13 : f32 to vector<1x16xf32>
    %24 = arith.mulf %22, %23 : vector<1x16xf32>
    %25 = vector.shape_cast %24 : vector<1x16xf32> to vector<1x16x1xf32>
    %26 = vector.broadcast %25 : vector<1x16x1xf32> to vector<1x16x256xf32>
    %27 = arith.mulf %0, %26 : vector<1x16x256xf32>
    %c0_14 = arith.constant 0 : index
    %c0_15 = arith.constant 0 : index
    %c0_16 = arith.constant 0 : index
    %28 = vector.load %arg4[%c0_14, %c0_15, %c0_16] : memref<1x16x256xf32, #tpu.memory_space<vmem>>, vector<1x16x256xf32>
    tpu.vector_store %arg4[%c0_14, %c0_15, %c0_16], %27 {strides = array<i32>} : memref<1x16x256xf32, #tpu.memory_space<vmem>>, vector<1x16x256xf32>,
    return
  }
  func.func @transform_0(%arg0: i32) -> (i32, i32, i32) {
    %c0_i32 = arith.constant 0 : i32
    %c0_i32_0 = arith.constant 0 : i32
    %c0_i32_1 = arith.constant 0 : i32
    return %arg0, %c0_i32, %c0_i32_0 : i32, i32, i32
  }
  func.func @transform_1(%arg0: i32) -> (i32, i32) {
    %c0_i32 = arith.constant 0 : i32
    %c0_i32_0 = arith.constant 0 : i32
    %c0_i32_1 = arith.constant 0 : i32
    return %c0_i32, %c0_i32_0 : i32, i32
  }
  func.func @transform_2(%arg0: i32) -> (i32, i32) {
    %c0_i32 = arith.constant 0 : i32
    %c0_i32_0 = arith.constant 0 : i32
    %c0_i32_1 = arith.constant 0 : i32
    return %c0_i32, %c0_i32_0 : i32, i32
  }
  func.func @transform_3(%arg0: i32) -> (i32, i32, i32) {
    %c0_i32 = arith.constant 0 : i32
    %c0_i32_0 = arith.constant 0 : i32
    %c0_i32_1 = arith.constant 0 : i32
    return %arg0, %c0_i32, %c0_i32_0 : i32, i32, i32
  }
}

</mosaic_0001>

<llo_original>
// kernel: squeeze_excitation.1
$region0: #{squeeze_excitation.1}
  #allocation0 [shape = 'u32[]', space=smem, size = 0x4, offset = 0x4, fixed_abs, tag = 'smem constant byte address 0x4 - core index']
  #allocation1 [shape = 'u32[144,128]{1,0:T(1,128)}', space=vmem, size = 0x12000, scoped, tag = 'internal scratch']
  %s0 = inlined_call_operand.vmem [shape: f32[2,16,256], index: 0, kind: input, shape index: {}]
  %s1 = inlined_call_operand.vmem [shape: f32[2,16], index: 1, kind: input, shape index: {}]
  %s2 = inlined_call_operand.vmem [shape: f32[2,16], index: 2, kind: input, shape index: {}]
  %s3 = inlined_call_operand.vmem [shape: f32[2,16,256], index: 3, kind: output, shape index: {}]
  %s4 = sld [smem:[#allocation0]]
  $region45: #{squeeze_excitation.1} parent=0
    _
  %s6 = ssub.s32 1, %s4
  %s7 = scalar_select 0, %s6, %s4
  loop: start=0, step=1, limit=4
  $region2: #{squeeze_excitation.1} parent=0 // loop_pre_header
    _
  $region3: #{squeeze_excitation.1} parent=0 // loop_header
    %s9 = sphi 0, %s13
    %p10 = scmp.ge.s32.totalorder %s9, 4
    %s19 = sphi 0, %s21
    %s22 = sphi 0, %s19
    %s23 = sphi 0, %s22
    %s39 = sphi 0, %s23
    %s43 = sphi 0, %s43
    %s45 = sphi 0, %s43
    %s46 = sphi 0, %s45
    %s60 = sphi 0, %s46
    %s64 = sphi 0, %s64
    %s66 = sphi 0, %s64
    %s67 = sphi 0, %s66
    %s81 = sphi 0, %s67
    %s87 = sphi 0, %s89
    %s90 = sphi 0, %s87
    %s91 = sphi 0, %s90
    %s107 = sphi 0, %s91
  $region4: #{squeeze_excitation.1} parent=0 // loop_header_branch
    %12 = sbr.rel (%p10) target = $region8
  $region5: #{squeeze_excitation.1} parent=0 // loop_body
    %s14 = ssub.s32 %s9, 1
    %s15 = ssub.s32 %s9, 2
    %s16 = sadd.s32 %s9, 1
    %s17 = ssub.s32 %s9, %s16
    %p18 = scmp.eq.s32.totalorder %s17, 0
    %s20 = sadd.s32 %s19, 1
    %s21 = scalar_select %p18, %s19, %s20
    %p24 = pneg %p18
    %p25 = scmp.eq.s32.totalorder %s9, 1
    %p26 = por %p24, %p25
    %p27 = scmp.ne.s32.totalorder %s19, %s22
    %p28 = scmp.eq.s32.totalorder %s9, 0
    %p29 = por %p27, %p28
    %p30 = scmp.ne.s32.totalorder %s19, %s22
    %p31 = scmp.eq.s32.totalorder %s14, 1
    %p32 = por %p30, %p31
    %p33 = scmp.ne.s32.totalorder %s22, %s23
    %p34 = scmp.eq.s32.totalorder %s14, 0
    %p35 = por %p33, %p34
    %p36 = scmp.ne.s32.totalorder %s22, %s23
    %p37 = scmp.eq.s32.totalorder %s15, 1
    %p38 = por %p36, %p37
    %p40 = scmp.ne.s32.totalorder %s23, %s39
    %p41 = scmp.eq.s32.totalorder %s15, 0
    %p42 = por %p40, %p41
    %s44 = sadd.s32 %s43, 1
    %p47 = scmp.eq.s32.totalorder %s9, 1
    %p48 = scmp.ne.s32.totalorder %s43, %s45
    %p49 = scmp.eq.s32.totalorder %s9, 0
    %p50 = por %p48, %p49
    %p51 = scmp.ne.s32.totalorder %s43, %s45
    %p52 = scmp.eq.s32.totalorder %s14, 1
    %p53 = por %p51, %p52
    %p54 = scmp.ne.s32.totalorder %s45, %s46
    %p55 = scmp.eq.s32.totalorder %s14, 0
    %p56 = por %p54, %p55
    %p57 = scmp.ne.s32.totalorder %s45, %s46
    %p58 = scmp.eq.s32.totalorder %s15, 1
    %p59 = por %p57, %p58
    %p61 = scmp.ne.s32.totalorder %s46, %s60
    %p62 = scmp.eq.s32.totalorder %s15, 0
    %p63 = por %p61, %p62
    %s65 = sadd.s32 %s64, 1
    %p68 = scmp.eq.s32.totalorder %s9, 1
    %p69 = scmp.ne.s32.totalorder %s64, %s66
    %p70 = scmp.eq.s32.totalorder %s9, 0
    %p71 = por %p69, %p70
    %p72 = scmp.ne.s32.totalorder %s64, %s66
    %p73 = scmp.eq.s32.totalorder %s14, 1
    %p74 = por %p72, %p73
    %p75 = scmp.ne.s32.totalorder %s66, %s67
    %p76 = scmp.eq.s32.totalorder %s14, 0
    %p77 = por %p75, %p76
    %p78 = scmp.ne.s32.totalorder %s66, %s67
    %p79 = scmp.eq.s32.totalorder %s15, 1
    %p80 = por %p78, %p79
    %p82 = scmp.ne.s32.totalorder %s67, %s81
    %p83 = scmp.eq.s32.totalorder %s15, 0
    %p84 = por %p82, %p83
    %s85 = ssub.s32 %s9, %s16
    %p86 = scmp.eq.s32.totalorder %s85, 0
    %s88 = sadd.s32 %s87, 1
    %s89 = scalar_select %p86, %s87, %s88
    %p92 = pneg %p86
    %p93 = scmp.eq.s32.totalorder %s9, 1
    %p94 = por %p92, %p93
    %p95 = scmp.ne.s32.totalorder %s87, %s90
    %p96 = scmp.eq.s32.totalorder %s9, 0
    %p97 = por %p95, %p96
    %p98 = scmp.ne.s32.totalorder %s87, %s90
    %p99 = scmp.eq.s32.totalorder %s14, 1
    %p100 = por %p98, %p99
    %p101 = scmp.ne.s32.totalorder %s90, %s91
    %p102 = scmp.eq.s32.totalorder %s14, 0
    %p103 = por %p101, %p102
    %p104 = scmp.ne.s32.totalorder %s90, %s91
    %p105 = scmp.eq.s32.totalorder %s15, 1
    %p106 = por %p104, %p105
    %p108 = scmp.ne.s32.totalorder %s91, %s107
    %p109 = scmp.eq.s32.totalorder %s15, 0
    %p110 = por %p108, %p109
    %p111 = scmp.le.s32.totalorder 1, %s9
    %p112 = scmp.lt.s32.totalorder %s9, 3
    %p113 = pnand %p111, %p112
    %p114 = pneg %p113
    // Predicated region
    $region9: #{squeeze_excitation.1} parent=5 // pred_check
      _
    $region10: #{squeeze_excitation.1} parent=5 // pred_check_branch
      %116 = sbr.rel (%p113) target = $region12
    $region11: #{squeeze_excitation.1} parent=5 // pred_region
      %s117 = ssub.s32 %s9, 1
      // Predicated region
      $region13: #{squeeze_excitation.1} parent=11 // pred_check
        %p118 = pneg %p56
      $region14: #{squeeze_excitation.1} parent=11 // pred_check_branch
        %120 = sbr.rel (%p118) target = $region16
      $region15: #{squeeze_excitation.1} parent=11 // pred_region
        _
      $region16: #{squeeze_excitation.1} parent=11 // pred_fallthru
        _
      // Predicated region
      $region17: #{squeeze_excitation.1} parent=11 // pred_check
        %p121 = pneg %p77
      $region18: #{squeeze_excitation.1} parent=11 // pred_check_branch
        %123 = sbr.rel (%p121) target = $region20
      $region19: #{squeeze_excitation.1} parent=11 // pred_region
        _
      $region20: #{squeeze_excitation.1} parent=11 // pred_fallthru
        _
    $region12: #{squeeze_excitation.1} parent=5 // pred_fallthru
      _
    %p124 = scmp.lt.s32.totalorder %s9, 2
    // Predicated region
    $region21: #{squeeze_excitation.1} parent=5 // pred_check
      %p125 = pneg %p124
    $region22: #{squeeze_excitation.1} parent=5 // pred_check_branch
      %127 = sbr.rel (%p125) target = $region24
    $region23: #{squeeze_excitation.1} parent=5 // pred_region
      // Predicated region
      $region25: #{squeeze_excitation.1} parent=23 // pred_check
        %p128 = pneg %p29
      $region26: #{squeeze_excitation.1} parent=23 // pred_check_branch
        %130 = sbr.rel (%p128) target = $region28
      $region27: #{squeeze_excitation.1} parent=23 // pred_region
        %p131 = scmp.lt.s32.totalorder %s9, 1
        %s132 = scalar_select %p131, %s9, 1
        %s133 = smul.addr %s132, 4
        %s134 = smul.addr %s133, 8
        %s135 = scalar_lea.vmem %s0, %s134
      $region28: #{squeeze_excitation.1} parent=23 // pred_fallthru
        _
    $region24: #{squeeze_excitation.1} parent=5 // pred_fallthru
      _
    %p136 = scmp.le.s32.totalorder 1, %s9
    %p137 = scmp.lt.s32.totalorder %s9, 3
    %p138 = pnand %p136, %p137
    %p139 = pneg %p138
    // Predicated region
    $region29: #{squeeze_excitation.1} parent=5 // pred_check
      _
    $region30: #{squeeze_excitation.1} parent=5 // pred_check_branch
      %141 = sbr.rel (%p138) target = $region32
    $region31: #{squeeze_excitation.1} parent=5 // pred_region
      %s142 = ssub.s32 %s9, 1
      %p143 = scmp.lt.s32.totalorder %s14, 1
      %s144 = scalar_select %p143, %s14, 1
      %s145 = smul.addr %s144, 4
      %s146 = smul.addr %s145, 8
      %s147 = scalar_lea.vmem %s0, %s146
      %p148 = pneg %p35
      %p149 = pneg %p32
      %p150 = pneg %p56
      %p151 = pneg %p53
      %p152 = pneg %p77
      %p153 = pneg %p74
      %p154 = pneg %p103
      %p155 = pneg %p100
      %p156 = scmp.lt.s32.totalorder %s14, 1
      %s157 = scalar_select %p156, %s14, 1
      %s158 = smul.addr %s157, 4
      %s159 = smul.addr %s158, 8
      %s160 = scalar_lea.vmem %s3, %s159
      %p161 = scmp.lt.s32.totalorder %s14, 1
      %s162 = scalar_select %p161, %s14, 1
      %s163 = smul.addr %s162, 4
      %s164 = smul.addr %s163, 8
      %s165 = scalar_lea.vmem %s0, %s164
      %p166 = scmp.lt.s32.totalorder %s14, 1
      %s167 = scalar_select %p166, %s14, 1
      %s168 = smul.addr %s167, 4
      %s169 = smul.addr %s168, 8
      %s170 = scalar_lea.vmem %s3, %s169
      %v171 = vld [vmem:[%s165] sm:$0xff]
      %v172 = vld [vmem:[%s165 + $0x8] sm:$0xff]
      %v173 = vld [vmem:[%s165 + $0x10] sm:$0xff]
      %v174 = vld [vmem:[%s165 + $0x18] sm:$0xff]
      %v175 = vadd.f32 %v171, %v172
      %176 = vadd.xlane.f32.xlu0 %v175
      %v177 = vpop.xlane.xlu0 %176
      %v178 = vadd.f32 %v173, %v174
      %179 = vadd.xlane.f32.xlu0 %v178
      %v180 = vpop.xlane.xlu0 %179
      %v181 = vmul.f32 %v177, 0.00390625
      %v182 = vmul.f32 %v180, 0.00390625
      %v183 = vld [vmem:[%s1] sm:$0x3]
      %v186 = vlaneseq
      %v187 = vand.u32 %v186, 127
      %v188 = vlaneseq
      %v189 = vshrl.u32 %v188, 7
      %v190 = vsub.s32 %v187, %v189
      %v191 = vrot.slane %v181, %v190
      %v192 = vadd.s32 %v187, 4294967288
      %v193 = vlaneseq
      %v194 = vshrl.u32 %v193, 7
      %v195 = vsub.s32 %v192, %v194
      %v196 = vrot.slane %v182, %v195
      %vm197 = vcmask 130112
      %v198 = vsel %vm197, %v196, %v191
      %v200 = vmul.f32 %v183, %v198
      %vm201 = vcmask 123904
      %v202 = vsel %vm201, %v200, 0.0
      %203 = vadd.xlane.f32.xlu0 %v202
      %v204 = vpop.xlane.xlu0 %203
      %v205 = vmax.f32 %v204, 0.0
      %v206 = vld [vmem:[%s2] sm:$0x3]
      %v207 = vmul.f32 %v206, %v205
      %v208 = vsel %vm201, %v207, 0.0
      %v209 = vrot.slane %v208, 4
      %v210 = vadd.f32 %v208, %v209
      %v211 = vrot.slane %v210, 2
      %v212 = vadd.f32 %v210, %v211
      %v213 = vrot.slane %v212, 1
      %v214 = vadd.f32 %v212, %v213
      %v215 = vadd.f32 %v214, 3.0
      %v216 = vmax.f32 %v215, 0.0
      %v217 = vmin.f32 %v216, 6.0
      %v218 = vmul.f32 %v214, %v217
      %v219 = vmul.f32 %v218, 0.16666667
      %221 = vbcast.lane.b32.xlu0 %v219, 256
      %v222 = vpop.permute.xlu0 %221
      %s224 = sor.u32 256, 8
      %225 = vbcast.lane.b32.xlu0 %v219, %s224
      %v226 = vpop.permute.xlu0 %225
      %v227 = vmul.f32 %v171, %v222
      %v228 = vmul.f32 %v172, %v222
      %v229 = vmul.f32 %v173, %v226
      %v230 = vmul.f32 %v174, %v226
      %231 = vst [vmem:[%s170] sm:$0xff] %v227
      %232 = vst [vmem:[%s170 + $0x8] sm:$0xff] %v228
      %233 = vst [vmem:[%s170 + $0x10] sm:$0xff] %v229
      %234 = vst [vmem:[%s170 + $0x18] sm:$0xff] %v230
      %p235 = scmp.lt.s32.totalorder %s14, 1
      %s236 = scalar_select %p235, %s14, 1
      %s237 = smul.addr %s236, 4
      %s238 = smul.addr %s237, 8
      %s239 = scalar_lea.vmem %s3, %s238
      // Predicated region
      $region33: #{squeeze_excitation.1} parent=31 // pred_check
        %p240 = pneg %p100
      $region34: #{squeeze_excitation.1} parent=31 // pred_check_branch
        %242 = sbr.rel (%p240) target = $region36
      $region35: #{squeeze_excitation.1} parent=31 // pred_region
        _
      $region36: #{squeeze_excitation.1} parent=31 // pred_fallthru
        _
    $region32: #{squeeze_excitation.1} parent=5 // pred_fallthru
      _
    %p243 = scmp.le.s32.totalorder 2, %s9
    // Predicated region
    $region37: #{squeeze_excitation.1} parent=5 // pred_check
      %p244 = pneg %p243
    $region38: #{squeeze_excitation.1} parent=5 // pred_check_branch
      %246 = sbr.rel (%p244) target = $region40
    $region39: #{squeeze_excitation.1} parent=5 // pred_region
      %s247 = ssub.s32 %s9, 2
      // Predicated region
      $region41: #{squeeze_excitation.1} parent=39 // pred_check
        %p248 = pneg %p106
      $region42: #{squeeze_excitation.1} parent=39 // pred_check_branch
        %250 = sbr.rel (%p248) target = $region44
      $region43: #{squeeze_excitation.1} parent=39 // pred_region
        %p251 = scmp.lt.s32.totalorder %s15, 1
        %s252 = scalar_select %p251, %s15, 1
        %s253 = smul.addr %s252, 4
        %s254 = smul.addr %s253, 8
        %s255 = scalar_lea.vmem %s3, %s254
      $region44: #{squeeze_excitation.1} parent=39 // pred_fallthru
        _
    $region40: #{squeeze_excitation.1} parent=5 // pred_fallthru
      _
  $region6: #{squeeze_excitation.1} parent=0 // loop_footer
    %s13 = sadd.s32 1, %s9
  $region7: #{squeeze_excitation.1} parent=0 // loop_footer_branch
    %8 = sbr.rel target = $region3
  $region8: #{squeeze_excitation.1} parent=0 // loop_exit
    _

</llo_original>
